<compile_context>
chip_gen: v5e
topology: v5e:2x2
jax: 0.10.0
libtpu: 0.0.40
codegen_flags: <defaults>
</compile_context>

<pallas_src>
import functools

import jax
import jax.numpy as jnp
from jax import lax
from jax.experimental import pallas as pl
from jax.experimental.pallas import tpu as pltpu


# ----------------------------- device-aware knobs ----------------------------
def _device_kind():
    try:
        return jax.devices()[0].device_kind.lower()
    except Exception:
        return ""


_KIND = _device_kind()
# v5e/v6e have 128 MiB physical VMEM -> bigger scoped limit + bigger row tiles.
# v7x (64 MiB) and unknown chips keep the conservative budget.
_BIG_VMEM = ("v5" in _KIND) or ("v6" in _KIND)
_VMEM_LIMIT = (96 if _BIG_VMEM else 48) * 1024 * 1024
_ROW_CAP = 512 if _BIG_VMEM else 256
# v5e has no bf16 VPU/EUP -> keep the GELU intermediate in f32 there.
_FFN_BF16 = "v5" not in _KIND
_HEAD_PAD = 128          # classifier logits padded to 128 lanes inside kernel

# Falls back to default double buffering if pipeline_mode=pl.Buffered(1) is not
# supported by the installed jax/Mosaic version.
_SINGLE_BUFFER_OK = [True]


def _cparams(semantics=None):
    return pltpu.CompilerParams(dimension_semantics=semantics,
                                vmem_limit_bytes=_VMEM_LIMIT)


def _pick_tile_m(m, cap):
    """Row tile: multiple of 8, divides m, <= cap, and leaves >=2 grid steps."""
    if m <= 8:
        return m
    hi = max(8, min(cap, m // 2 if m >= 16 else m))
    for t in range(hi, 7, -1):
        if m % t == 0 and t % 8 == 0:
            return t
    return m        # full-array block is always a legal layout


def _pick_block_b(batch, seq, row_cap):
    """Batch block for the fused layer kernel: divides B, keeps grid>=2."""
    if seq % 8 != 0:
        return batch    # full-dim block keeps the (8,128) sublane rule satisfied
    best = 1
    for bb in range(1, batch + 1):
        if batch % bb != 0:
            continue
        if bb * seq > row_cap and bb != 1:
            continue
        if batch >= 2 and batch // bb < 2:
            continue    # keep >=2 grid steps for v7x's dual TensorCore
        best = bb
    return best


def _ln(x, g, b, eps):
    mu = jnp.mean(x, axis=-1, keepdims=True)
    var = jnp.mean((x - mu) ** 2, axis=-1, keepdims=True)
    return (x - mu) * lax.rsqrt(var + eps) * g + b


# ----------------------------- layernorm (embeddings) ------------------------
def _layernorm_kernel(x_ref, g_ref, b_ref, o_ref, *, eps):
    x = x_ref[...].astype(jnp.float32)
    o_ref[...] = _ln(x, g_ref[...], b_ref[...], eps).astype(o_ref.dtype)


def layernorm(x, g, b, eps=1e-12, out_dtype=jnp.bfloat16):
    M, H = x.shape
    tm = _pick_tile_m(M, _ROW_CAP)
    return pl.pallas_call(
        functools.partial(_layernorm_kernel, eps=eps),
        out_shape=jax.ShapeDtypeStruct((M, H), out_dtype),
        grid=(M // tm,),
        in_specs=[pl.BlockSpec((tm, H), lambda i: (i, 0)),
                  pl.BlockSpec((1, H), lambda i: (0, 0)),
                  pl.BlockSpec((1, H), lambda i: (0, 0))],
        out_specs=pl.BlockSpec((tm, H), lambda i: (i, 0)),
        compiler_params=_cparams(("parallel",)),
    )(x, g.reshape(1, H), b.reshape(1, H))


# --------------------- fully fused DistilBERT encoder layer ------------------
def _encoder_layer_kernel(x_ref, mask_ref, wqkv_ref, bqkv_ref, wo_ref, bo_ref,
                          g1_ref, be1_ref, w1_ref, bf1_ref, w2_ref, bf2_ref,
                          g2_ref, be2_ref, o_ref, *,
                          n_heads, head_dim, hidden, seq, bblk, eps, ffn_bf16):
    x = x_ref[...]                                           # (rows, H) bf16

    # ---- fused QKV projection (1/sqrt(dh) pre-folded into the Q columns) ----
    qkv = jnp.dot(x, wqkv_ref[...], preferred_element_type=jnp.float32)
    qkv = (qkv + bqkv_ref[...]).astype(jnp.bfloat16)         # (rows, 3H)

    # ---- self-attention, output projection folded into the head loop -------
    blocks = []
    for b in range(bblk):                                    # static unroll
        qkv_b = qkv[b * seq:(b + 1) * seq, :]                # sublane slice
        mbias = mask_ref[b]                                  # (1, S) key-mask bias
        acc = jnp.zeros((seq, hidden), jnp.float32)
        # TODO(synk): odd heads slice the 2304-lane qkv value at a 64-lane
        # offset (one lane relayout each); a head-pair column reorder would
        # shave those XLU ops but is left out for clarity.
        for h in range(n_heads):
            q = qkv_b[:, h * head_dim:(h + 1) * head_dim]
            k = qkv_b[:, hidden + h * head_dim:hidden + (h + 1) * head_dim]
            v = qkv_b[:, 2 * hidden + h * head_dim:
                      2 * hidden + (h + 1) * head_dim]
            # q @ k^T via last-dim contraction (no transpose materialized).
            s = lax.dot_general(q, k, (((1,), (1,)), ((), ())),
                                preferred_element_type=jnp.float32)
            s = s + mbias
            m = jnp.max(s, axis=-1, keepdims=True)
            p = jnp.exp(s - m)
            p = p * pl.reciprocal(jnp.sum(p, axis=-1, keepdims=True),
                                  approx=True)
            ctx = jnp.dot(p.astype(jnp.bfloat16), v,
                          preferred_element_type=jnp.float32)
            # fold the output projection: ctx_h @ wo[h*dh:(h+1)*dh, :]
            acc = acc + jnp.dot(ctx.astype(jnp.bfloat16),
                                wo_ref[h * head_dim:(h + 1) * head_dim, :],
                                preferred_element_type=jnp.float32)
        blocks.append(acc)
    attn = blocks[0] if bblk == 1 else jnp.concatenate(blocks, axis=0)

    # ---- residual + LayerNorm 1 ---------------------------------------------
    r1 = x.astype(jnp.float32) + attn + bo_ref[...]
    x1 = _ln(r1, g1_ref[...], be1_ref[...], eps)             # f32 (rows, H)

    # ---- FFN (w1 -> GELU -> w2) + residual + LayerNorm 2, all in VMEM -------
    h1 = jnp.dot(x1.astype(jnp.bfloat16), w1_ref[...],
                 preferred_element_type=jnp.float32) + bf1_ref[...]
    if ffn_bf16:                                             # v6e/v7x: bf16 VPU/EUP
        h1 = h1.astype(jnp.bfloat16)
    # TODO(synk): HF DistilBERT uses exact (erf) GELU; tanh approximation used
    # here for a simple, known-good Mosaic lowering (small numeric drift).
    h1 = jax.nn.gelu(h1, approximate=True)
    y = jnp.dot(h1.astype(jnp.bfloat16), w2_ref[...],
                preferred_element_type=jnp.float32) + bf2_ref[...]
    out = _ln(x1 + y, g2_ref[...], be2_ref[...], eps)
    o_ref[...] = out.astype(o_ref.dtype)


def _encoder_layer_call(x, mask_bias, layer, cfg, single_buffer):
    M, H = x.shape
    B = mask_bias.shape[0]
    S = M // B
    NH, DH, FF = cfg["n_heads"], cfg["head_dim"], cfg["ffn"]
    bblk = _pick_block_b(B, S, _ROW_CAP)
    rows = bblk * S

    def wspec(shape):
        # Grid-invariant weight: single-buffer it to halve its VMEM footprint.
        if single_buffer:
            return pl.BlockSpec(shape, lambda i: (0,) * len(shape),
                                pipeline_mode=pl.Buffered(1))
        return pl.BlockSpec(shape, lambda i: (0,) * len(shape))

    kernel = functools.partial(_encoder_layer_kernel, n_heads=NH, head_dim=DH,
                               hidden=H, seq=S, bblk=bblk, eps=1e-12,
                               ffn_bf16=_FFN_BF16)
    return pl.pallas_call(
        kernel,
        out_shape=jax.ShapeDtypeStruct((M, H), jnp.bfloat16),
        grid=(B // bblk,),
        in_specs=[
            pl.BlockSpec((rows, H), lambda i: (i, 0)),          # x
            pl.BlockSpec((bblk, 1, S), lambda i: (i, 0, 0)),    # mask bias
            wspec((H, 3 * H)),                                  # wqkv
            pl.BlockSpec((1, 3 * H), lambda i: (0, 0)),         # bqkv
            wspec((H, H)),                                      # wo
            pl.BlockSpec((1, H), lambda i: (0, 0)),             # bo
            pl.BlockSpec((1, H), lambda i: (0, 0)),             # ln1 gamma
            pl.BlockSpec((1, H), lambda i: (0, 0)),             # ln1 beta
            wspec((H, FF)),                                     # w1
            pl.BlockSpec((1, FF), lambda i: (0, 0)),            # b1
            wspec((FF, H)),                                     # w2
            pl.BlockSpec((1, H), lambda i: (0, 0)),             # b2
            pl.BlockSpec((1, H), lambda i: (0, 0)),             # ln2 gamma
            pl.BlockSpec((1, H), lambda i: (0, 0)),             # ln2 beta
        ],
        out_specs=pl.BlockSpec((rows, H), lambda i: (i, 0)),
        compiler_params=_cparams(("parallel",)),
    )(x, mask_bias,
      layer["wqkv"], layer["bqkv"].reshape(1, 3 * H),
      layer["wo"], layer["bo"].reshape(1, H),
      layer["ln1_g"].reshape(1, H), layer["ln1_b"].reshape(1, H),
      layer["w1"], layer["b1"].reshape(1, FF),
      layer["w2"], layer["b2"].reshape(1, H),
      layer["ln2_g"].reshape(1, H), layer["ln2_b"].reshape(1, H))


def encoder_layer(x, mask_bias, layer, cfg):
    if _SINGLE_BUFFER_OK[0]:
        try:
            return _encoder_layer_call(x, mask_bias, layer, cfg,
                                       single_buffer=True)
        except Exception:
            # pl.Buffered(1) (single-buffered invariant weights) unsupported on
            # this jax/Mosaic version -> fall back to default double buffering.
            _SINGLE_BUFFER_OK[0] = False
    return _encoder_layer_call(x, mask_bias, layer, cfg, single_buffer=False)


# ----------------------------- classifier head --------------------------------
def _head_kernel(pooled_ref, emoji_ref, we_ref, be_ref, wcp_ref, wce_ref,
                 bc_ref, o_ref):
    # emoji projection; the *5.0 scale is pre-folded into we/be.
    emoji = jnp.dot(emoji_ref[...], we_ref[...],
                    preferred_element_type=jnp.float32) + be_ref[...]
    # dropout(p=0.1) is identity at inference.
    # concat([pooled, emoji]) @ W_c == pooled @ W_c[:H] + emoji @ W_c[H:]
    out = jnp.dot(pooled_ref[...], wcp_ref[...],
                  preferred_element_type=jnp.float32)
    out = out + jnp.dot(emoji.astype(wce_ref.dtype), wce_ref[...],
                        preferred_element_type=jnp.float32)
    o_ref[...] = out + bc_ref[...]


def classify_head(pooled, emoji_feats, params, n_classes):
    B, H = pooled.shape
    E = emoji_feats.shape[1]
    NE = params["we"].shape[1]
    NP = params["bc_pad"].shape[1]
    out = pl.pallas_call(
        _head_kernel,
        out_shape=jax.ShapeDtypeStruct((B, NP), jnp.float32),
        in_specs=[pl.BlockSpec((B, H), lambda: (0, 0)),
                  pl.BlockSpec((B, E), lambda: (0, 0)),
                  pl.BlockSpec((E, NE), lambda: (0, 0)),
                  pl.BlockSpec((1, NE), lambda: (0, 0)),
                  pl.BlockSpec((H, NP), lambda: (0, 0)),
                  pl.BlockSpec((NE, NP), lambda: (0, 0)),
                  pl.BlockSpec((1, NP), lambda: (0, 0))],
        out_specs=pl.BlockSpec((B, NP), lambda: (0, 0)),
        compiler_params=_cparams(),
    )(pooled, emoji_feats.astype(jnp.bfloat16), params["we"], params["be"],
      params["wc_pooled"], params["wc_emoji"], params["bc_pad"])
    return out[:, :n_classes]


# ----------------------------- DistilBERT-style encoder ----------------------
def distilbert_forward(params, input_ids, attention_mask, cfg):
    B, S = input_ids.shape
    H = cfg["hidden"]
    M = B * S
    # TODO(synk): embedding gather left to XLA (no clean Pallas gather here).
    x = params["word_emb"][input_ids] + params["pos_emb"][None, :S, :]
    x = layernorm(x.reshape(M, H), params["emb_ln_g"], params["emb_ln_b"])
    # key-mask bias as (B, 1, S) so its BlockSpec uses full dims on the last
    # two axes (review fix).
    mask_bias = ((attention_mask.astype(jnp.float32) - 1.0) * 1e9
                 ).reshape(B, 1, S)
    for layer in params["layers"]:
        x = encoder_layer(x, mask_bias, layer, cfg)           # one call / layer
    return x.reshape(B, S, H)


def toxicity_forward(params, input_ids, attention_mask, emoji_feats, cfg):
    last_hidden = distilbert_forward(params, input_ids, attention_mask, cfg)
    pooled = last_hidden[:, 0, :]                             # CLS token
    return classify_head(pooled, emoji_feats, params, cfg["n_classes"])


# ----------------------------- deterministic params --------------------------
def init_params(key, cfg):
    H, NH, DH, FF = cfg["hidden"], cfg["n_heads"], cfg["head_dim"], cfg["ffn"]
    V, P, L, NC = cfg["vocab"], cfg["max_pos"], cfg["n_layers"], cfg["n_classes"]
    scale = 1.0 / (DH ** 0.5)

    def nrm(k, shape, std=0.02):
        return jax.random.normal(k, shape, jnp.float32) * std

    keys = jax.random.split(key, 4 + L)
    we = nrm(keys[2], (3, 64))                     # emoji_layer: Linear(3, 64)
    wc = nrm(keys[3], (H + 64, NC))                # classifier: Linear(832, 6)
    bc = jnp.zeros((NC,), jnp.float32)
    # Hoisted classifier-head constants: fold the fixed *5.0 emoji scale into
    # the emoji projection, pre-split the classifier weight at the concat
    # boundary, and pre-pad logits to 128 lanes for an unmasked store.
    wc_pad = jnp.zeros((H + 64, _HEAD_PAD), jnp.float32).at[:, :NC].set(wc)

    params = {
        "word_emb": nrm(keys[0], (V, H)).astype(jnp.bfloat16),
        "pos_emb": nrm(keys[1], (P, H)).astype(jnp.bfloat16),
        "emb_ln_g": jnp.ones((H,), jnp.float32),
        "emb_ln_b": jnp.zeros((H,), jnp.float32),
        "layers": [],
        "we": (we * 5.0).astype(jnp.bfloat16),
        "be": jnp.zeros((1, 64), jnp.float32),                 # (b*5) with b=0
        "wc_pooled": wc_pad[:H].astype(jnp.bfloat16),
        "wc_emoji": wc_pad[H:].astype(jnp.bfloat16),
        "bc_pad": jnp.zeros((1, _HEAD_PAD), jnp.float32).at[0, :NC].set(bc),
    }
    for li in range(L):
        lk = jax.random.split(keys[4 + li], 6)
        wq, wk, wv = nrm(lk[0], (H, H)), nrm(lk[1], (H, H)), nrm(lk[2], (H, H))
        zH = jnp.zeros((H,), jnp.float32)
        params["layers"].append({
            # fused QKV; attention scale 1/sqrt(dh) folded into the Q columns
            "wqkv": jnp.concatenate([wq * scale, wk, wv],
                                    axis=1).astype(jnp.bfloat16),
            "bqkv": jnp.zeros((3 * H,), jnp.float32),
            "wo": nrm(lk[3], (H, H)).astype(jnp.bfloat16),
            "bo": zH,
            "ln1_g": jnp.ones((H,), jnp.float32), "ln1_b": zH,
            "w1": nrm(lk[4], (H, FF)).astype(jnp.bfloat16),
            "b1": jnp.zeros((FF,), jnp.float32),
            "w2": nrm(lk[5], (FF, H)).astype(jnp.bfloat16),
            "b2": zH,
            "ln2_g": jnp.ones((H,), jnp.float32), "ln2_b": zH,
        })
    return params


if __name__ == "__main__":
    cfg = dict(hidden=768, n_heads=12, head_dim=64, ffn=3072,
               n_layers=2, vocab=100, max_pos=64, n_classes=6)

    key = jax.random.PRNGKey(0)
    kp, kid, kemoji = jax.random.split(key, 3)
    params = init_params(kp, cfg)

    B, S = 2, 8
    input_ids = jax.random.randint(kid, (B, S), 0, cfg["vocab"], dtype=jnp.int32)
    attention_mask = jnp.ones((B, S), jnp.int32).at[1, S - 2:].set(0)  # padding
    emoji_feats = jax.random.normal(kemoji, (B, 3), jnp.float32)

    logits = toxicity_forward(params, input_ids, attention_mask, emoji_feats,
                              cfg)
    logits = jax.block_until_ready(logits)
    assert logits.shape == (B, 6) and logits.dtype == jnp.float32
    assert bool(jnp.all(jnp.isfinite(logits)))
    print("KERNEL_OK")
</pallas_src>

<mosaic_0001>
module attributes {stable_mosaic.version = 11 : i64} {
  func.func @_layernorm_kernel(%arg0: i32, %arg1: memref<8x768xbf16, #tpu.memory_space<vmem>>, %arg2: memref<1x768xf32, #tpu.memory_space<vmem>>, %arg3: memref<1x768xf32, #tpu.memory_space<vmem>>, %arg4: memref<8x768xbf16, #tpu.memory_space<vmem>>) attributes {dimension_semantics = [#tpu.dimension_semantics<parallel>], iteration_bounds = array<i64: 2>, scalar_prefetch = 0 : i64, scratch_operands = 0 : i64, tpu.core_type = #tpu.core_type<tc>, window_params = [{transform_indices = @transform_0, window_bounds = array<i64: 8, 768>}, {pipeline_mode = #tpu.pipeline_mode<synchronous>, transform_indices = @transform_1, window_bounds = array<i64: 1, 768>}, {pipeline_mode = #tpu.pipeline_mode<synchronous>, transform_indices = @transform_2, window_bounds = array<i64: 1, 768>}, {transform_indices = @transform_3, window_bounds = array<i64: 8, 768>}]} {
    %c0 = arith.constant 0 : index
    %c0_0 = arith.constant 0 : index
    %0 = vector.load %arg1[%c0, %c0_0] : memref<8x768xbf16, #tpu.memory_space<vmem>>, vector<8x768xbf16>
    %1 = arith.extf %0 : vector<8x768xbf16> to vector<8x768xf32>
    %c0_1 = arith.constant 0 : index
    %c0_2 = arith.constant 0 : index
    %2 = vector.load %arg2[%c0_1, %c0_2] : memref<1x768xf32, #tpu.memory_space<vmem>>, vector<1x768xf32>
    %c0_3 = arith.constant 0 : index
    %c0_4 = arith.constant 0 : index
    %3 = vector.load %arg3[%c0_3, %c0_4] : memref<1x768xf32, #tpu.memory_space<vmem>>, vector<1x768xf32>
    %cst = arith.constant dense<0.000000e+00> : vector<8xf32>
    %4 = vector.multi_reduction <add>, %1, %cst [1] : vector<8x768xf32> to vector<8xf32>
    %5 = vector.shape_cast %4 : vector<8xf32> to vector<8x1xf32>
    %cst_5 = arith.constant 7.680000e+02 : f32
    %6 = vector.broadcast %cst_5 : f32 to vector<8x1xf32>
    %7 = arith.divf %5, %6 : vector<8x1xf32>
    %8 = vector.broadcast %7 : vector<8x1xf32> to vector<8x768xf32>
    %9 = arith.subf %1, %8 : vector<8x768xf32>
    %10 = arith.mulf %9, %9 : vector<8x768xf32>
    %cst_6 = arith.constant dense<0.000000e+00> : vector<8xf32>
    %11 = vector.multi_reduction <add>, %10, %cst_6 [1] : vector<8x768xf32> to vector<8xf32>
    %12 = vector.shape_cast %11 : vector<8xf32> to vector<8x1xf32>
    %cst_7 = arith.constant 7.680000e+02 : f32
    %13 = vector.broadcast %cst_7 : f32 to vector<8x1xf32>
    %14 = arith.divf %12, %13 : vector<8x1xf32>
    %15 = vector.broadcast %7 : vector<8x1xf32> to vector<8x768xf32>
    %16 = arith.subf %1, %15 : vector<8x768xf32>
    %cst_8 = arith.constant 9.99999996E-13 : f32
    %17 = vector.broadcast %cst_8 : f32 to vector<8x1xf32>
    %18 = arith.addf %14, %17 : vector<8x1xf32>
    %19 = math.rsqrt %18 : vector<8x1xf32>
    %20 = vector.broadcast %19 : vector<8x1xf32> to vector<8x768xf32>
    %21 = arith.mulf %16, %20 : vector<8x768xf32>
    %22 = vector.broadcast %2 : vector<1x768xf32> to vector<8x768xf32>
    %23 = arith.mulf %21, %22 : vector<8x768xf32>
    %24 = vector.broadcast %3 : vector<1x768xf32> to vector<8x768xf32>
    %25 = arith.addf %23, %24 : vector<8x768xf32>
    %26 = arith.truncf %25 : vector<8x768xf32> to vector<8x768xbf16>
    %c0_9 = arith.constant 0 : index
    %c0_10 = arith.constant 0 : index
    %27 = vector.load %arg4[%c0_9, %c0_10] : memref<8x768xbf16, #tpu.memory_space<vmem>>, vector<8x768xbf16>
    tpu.vector_store %arg4[%c0_9, %c0_10], %26 {strides = array<i32>} : memref<8x768xbf16, #tpu.memory_space<vmem>>, vector<8x768xbf16>,
    return
  }
  func.func @transform_0(%arg0: i32) -> (i32, i32) {
    %c0_i32 = arith.constant 0 : i32
    %c0_i32_0 = arith.constant 0 : i32
    return %arg0, %c0_i32 : i32, i32
  }
  func.func @transform_1(%arg0: i32) -> (i32, i32) {
    %c0_i32 = arith.constant 0 : i32
    %c0_i32_0 = arith.constant 0 : i32
    %c0_i32_1 = arith.constant 0 : i32
    return %c0_i32, %c0_i32_0 : i32, i32
  }
  func.func @transform_2(%arg0: i32) -> (i32, i32) {
    %c0_i32 = arith.constant 0 : i32
    %c0_i32_0 = arith.constant 0 : i32
    %c0_i32_1 = arith.constant 0 : i32
    return %c0_i32, %c0_i32_0 : i32, i32
  }
  func.func @transform_3(%arg0: i32) -> (i32, i32) {
    %c0_i32 = arith.constant 0 : i32
    %c0_i32_0 = arith.constant 0 : i32
    return %arg0, %c0_i32 : i32, i32
  }
}

</mosaic_0001>

<llo_original>
// kernel: tpu_custom_call.1
$region0: #{tpu_custom_call.1}
  #allocation0 [shape = 'u32[]', space=smem, size = 0x4, offset = 0x4, fixed_abs, tag = 'smem constant byte address 0x4 - core index']
  #allocation1 [shape = 'u32[72,128]{1,0:T(1,128)}', space=vmem, size = 0x9000, scoped, tag = 'internal scratch']
  %s0 = inlined_call_operand.hbm [shape: bf16[16,768], index: 0, kind: input, shape index: {}]
  %s1 = inlined_call_operand.hbm [shape: f32[1,768], index: 1, kind: input, shape index: {}]
  %s2 = inlined_call_operand.hbm [shape: f32[1,768], index: 2, kind: input, shape index: {}]
  %s3 = inlined_call_operand.hbm [shape: bf16[16,768], index: 3, kind: output, shape index: {}]
  %s4 = sld [smem:[#allocation0]]
  $region57: #{tpu_custom_call.1} parent=0
    _
  %s6 = ssub.s32 1, %s4
  %s7 = scalar_select 0, %s6, %s4
  $region1: #{tpu_custom_call.1} parent=0
    #allocation2 [shape = 'u8[24576]{0}', space=vmem, size = 0x6000, scoped, tag = 'input window, operand 0']
    #allocation3 [shape = 's32[2]{0}', space=sflag, size = 0x8, scoped, tag = 'scoped memory for tpu_custom_call.1']
    #allocation4 [shape = 's32[2]{0}', space=sflag, size = 0x8, scoped, tag = 'scoped memory for tpu_custom_call.1']
    #allocation5 [shape = 'u8[3072]{0}', space=vmem, size = 0xc00, scoped, tag = 'input window, operand 1, single buffered']
    #allocation6 [shape = 's32[1]{0}', space=sflag, size = 0x4, scoped, tag = 'scoped memory for tpu_custom_call.1']
    #allocation7 [shape = 'u8[3072]{0}', space=vmem, size = 0xc00, scoped, tag = 'input window, operand 2, single buffered']
    #allocation8 [shape = 'u8[24576]{0}', space=vmem, size = 0x6000, scoped, tag = 'output window, operand 0']
    %8 = vsyncpa [#allocation3], 0
    %s9 = scalar_lea.sflag [#allocation3], 1
    %10 = vsyncpa %s9, 0
    %11 = vsyncpa [#allocation6], 0
    %12 = vsyncpa [#allocation4], 0
    %s13 = scalar_lea.sflag [#allocation4], 1
    %14 = vsyncpa %s13, 0
    loop: start=0, step=1, limit=4
    $region2: #{tpu_custom_call.1} parent=1 // loop_pre_header
      _
    $region3: #{tpu_custom_call.1} parent=1 // loop_header
      %s16 = sphi 0, %s20
      %p17 = scmp.ge.s32.totalorder %s16, 4
      %s26 = sphi 0, %s28
      %s29 = sphi 0, %s26
      %s30 = sphi 0, %s29
      %s46 = sphi 0, %s30
      %s50 = sphi 0, %s50
      %s52 = sphi 0, %s50
      %s53 = sphi 0, %s52
      %s67 = sphi 0, %s53
      %s71 = sphi 0, %s71
      %s73 = sphi 0, %s71
      %s74 = sphi 0, %s73
      %s88 = sphi 0, %s74
      %s94 = sphi 0, %s96
      %s97 = sphi 0, %s94
      %s98 = sphi 0, %s97
      %s114 = sphi 0, %s98
    $region4: #{tpu_custom_call.1} parent=1 // loop_header_branch
      %19 = sbr.rel (%p17) target = $region8
    $region5: #{tpu_custom_call.1} parent=1 // loop_body
      %s21 = ssub.s32 %s16, 1
      %s22 = ssub.s32 %s16, 2
      %s23 = sadd.s32 %s16, 1
      %s24 = ssub.s32 %s16, %s23
      %p25 = scmp.eq.s32.totalorder %s24, 0
      %s27 = sadd.s32 %s26, 1
      %s28 = scalar_select %p25, %s26, %s27
      %p31 = pneg %p25
      %p32 = scmp.eq.s32.totalorder %s16, 1
      %p33 = por %p31, %p32
      %p34 = scmp.ne.s32.totalorder %s26, %s29
      %p35 = scmp.eq.s32.totalorder %s16, 0
      %p36 = por %p34, %p35
      %p37 = scmp.ne.s32.totalorder %s26, %s29
      %p38 = scmp.eq.s32.totalorder %s21, 1
      %p39 = por %p37, %p38
      %p40 = scmp.ne.s32.totalorder %s29, %s30
      %p41 = scmp.eq.s32.totalorder %s21, 0
      %p42 = por %p40, %p41
      %p43 = scmp.ne.s32.totalorder %s29, %s30
      %p44 = scmp.eq.s32.totalorder %s22, 1
      %p45 = por %p43, %p44
      %p47 = scmp.ne.s32.totalorder %s30, %s46
      %p48 = scmp.eq.s32.totalorder %s22, 0
      %p49 = por %p47, %p48
      %s51 = sadd.s32 %s50, 1
      %p54 = scmp.eq.s32.totalorder %s16, 1
      %p55 = scmp.ne.s32.totalorder %s50, %s52
      %p56 = scmp.eq.s32.totalorder %s16, 0
      %p57 = por %p55, %p56
      %p58 = scmp.ne.s32.totalorder %s50, %s52
      %p59 = scmp.eq.s32.totalorder %s21, 1
      %p60 = por %p58, %p59
      %p61 = scmp.ne.s32.totalorder %s52, %s53
      %p62 = scmp.eq.s32.totalorder %s21, 0
      %p63 = por %p61, %p62
      %p64 = scmp.ne.s32.totalorder %s52, %s53
      %p65 = scmp.eq.s32.totalorder %s22, 1
      %p66 = por %p64, %p65
      %p68 = scmp.ne.s32.totalorder %s53, %s67
      %p69 = scmp.eq.s32.totalorder %s22, 0
      %p70 = por %p68, %p69
      %s72 = sadd.s32 %s71, 1
      %p75 = scmp.eq.s32.totalorder %s16, 1
      %p76 = scmp.ne.s32.totalorder %s71, %s73
      %p77 = scmp.eq.s32.totalorder %s16, 0
      %p78 = por %p76, %p77
      %p79 = scmp.ne.s32.totalorder %s71, %s73
      %p80 = scmp.eq.s32.totalorder %s21, 1
      %p81 = por %p79, %p80
      %p82 = scmp.ne.s32.totalorder %s73, %s74
      %p83 = scmp.eq.s32.totalorder %s21, 0
      %p84 = por %p82, %p83
      %p85 = scmp.ne.s32.totalorder %s73, %s74
      %p86 = scmp.eq.s32.totalorder %s22, 1
      %p87 = por %p85, %p86
      %p89 = scmp.ne.s32.totalorder %s74, %s88
      %p90 = scmp.eq.s32.totalorder %s22, 0
      %p91 = por %p89, %p90
      %s92 = ssub.s32 %s16, %s23
      %p93 = scmp.eq.s32.totalorder %s92, 0
      %s95 = sadd.s32 %s94, 1
      %s96 = scalar_select %p93, %s94, %s95
      %p99 = pneg %p93
      %p100 = scmp.eq.s32.totalorder %s16, 1
      %p101 = por %p99, %p100
      %p102 = scmp.ne.s32.totalorder %s94, %s97
      %p103 = scmp.eq.s32.totalorder %s16, 0
      %p104 = por %p102, %p103
      %p105 = scmp.ne.s32.totalorder %s94, %s97
      %p106 = scmp.eq.s32.totalorder %s21, 1
      %p107 = por %p105, %p106
      %p108 = scmp.ne.s32.totalorder %s97, %s98
      %p109 = scmp.eq.s32.totalorder %s21, 0
      %p110 = por %p108, %p109
      %p111 = scmp.ne.s32.totalorder %s97, %s98
      %p112 = scmp.eq.s32.totalorder %s22, 1
      %p113 = por %p111, %p112
      %p115 = scmp.ne.s32.totalorder %s98, %s114
      %p116 = scmp.eq.s32.totalorder %s22, 0
      %p117 = por %p115, %p116
      %p118 = scmp.le.s32.totalorder 1, %s16
      %p119 = scmp.lt.s32.totalorder %s16, 3
      %p120 = pnand %p118, %p119
      %p121 = pneg %p120
      // Predicated region
      $region9: #{tpu_custom_call.1} parent=5 // pred_check
        _
      $region10: #{tpu_custom_call.1} parent=5 // pred_check_branch
        %123 = sbr.rel (%p120) target = $region12
      $region11: #{tpu_custom_call.1} parent=5 // pred_region
        %s124 = ssub.s32 %s16, 1
        // Predicated region
        $region13: #{tpu_custom_call.1} parent=11 // pred_check
          %p125 = pneg %p63
        $region14: #{tpu_custom_call.1} parent=11 // pred_check_branch
          %127 = sbr.rel (%p125) target = $region16
        $region15: #{tpu_custom_call.1} parent=11 // pred_region
          %129 = vsyncadd [#allocation6], 0
          %s131 = sshll.u32 %s1, 4
          %s132 = int_to_ptr.hbm [resolvable:$true] %s131
          %s133 = sshll.u32 [#allocation5], 4
          %s134 = int_to_ptr.vmem [resolvable:$true] %s133
          %136 = dma.hbm_to_vmem [thread:$0]  %s132, 96, %s134, [#allocation6]
        $region16: #{tpu_custom_call.1} parent=11 // pred_fallthru
          _
        // Predicated region
        $region17: #{tpu_custom_call.1} parent=11 // pred_check
          %p137 = pneg %p84
        $region18: #{tpu_custom_call.1} parent=11 // pred_check_branch
          %139 = sbr.rel (%p137) target = $region20
        $region19: #{tpu_custom_call.1} parent=11 // pred_region
          %141 = vsyncadd [#allocation6], 0
          %s143 = sshll.u32 %s2, 4
          %s144 = int_to_ptr.hbm [resolvable:$true] %s143
          %s145 = sshll.u32 [#allocation7], 4
          %s146 = int_to_ptr.vmem [resolvable:$true] %s145
          %148 = dma.hbm_to_vmem [thread:$0]  %s144, 96, %s146, [#allocation6]
        $region20: #{tpu_custom_call.1} parent=11 // pred_fallthru
          _
      $region12: #{tpu_custom_call.1} parent=5 // pred_fallthru
        _
      %p149 = scmp.lt.s32.totalorder %s16, 2
      // Predicated region
      $region21: #{tpu_custom_call.1} parent=5 // pred_check
        %p150 = pneg %p149
      $region22: #{tpu_custom_call.1} parent=5 // pred_check_branch
        %152 = sbr.rel (%p150) target = $region24
      $region23: #{tpu_custom_call.1} parent=5 // pred_region
        // Predicated region
        $region25: #{tpu_custom_call.1} parent=23 // pred_check
          %p153 = pneg %p36
        $region26: #{tpu_custom_call.1} parent=23 // pred_check_branch
          %155 = sbr.rel (%p153) target = $region28
        $region27: #{tpu_custom_call.1} parent=23 // pred_region
          %s156 = sand.u32 %s26, 1
          %s157 = scalar_lea.sflag [#allocation3], %s156
          %s158 = sand.u32 %s26, 1
          %s159 = smul.addr %s158, 24
          %s160 = scalar_lea.vmem [#allocation2], %s159
          %162 = vsyncadd %s157, 0
          %s163 = smul.addr %s16, 6
          %s164 = smul.addr %s163, 4
          %s165 = scalar_lea.hbm %s0, %s164
          %s167 = sshll.u32 %s165, 4
          %s168 = int_to_ptr.hbm [resolvable:$true] %s167
          %s169 = sshll.u32 %s160, 4
          %s170 = int_to_ptr.vmem [resolvable:$true] %s169
          %172 = dma.hbm_to_vmem [thread:$0]  %s168, 384, %s170, %s157
        $region28: #{tpu_custom_call.1} parent=23 // pred_fallthru
          _
      $region24: #{tpu_custom_call.1} parent=5 // pred_fallthru
        _
      %p173 = scmp.le.s32.totalorder 1, %s16
      %p174 = scmp.lt.s32.totalorder %s16, 3
      %p175 = pnand %p173, %p174
      %p176 = pneg %p175
      // Predicated region
      $region29: #{tpu_custom_call.1} parent=5 // pred_check
        _
      $region30: #{tpu_custom_call.1} parent=5 // pred_check_branch
        %178 = sbr.rel (%p175) target = $region32
      $region31: #{tpu_custom_call.1} parent=5 // pred_region
        %s179 = ssub.s32 %s16, 1
        %s180 = sand.u32 %s29, 1
        %s181 = scalar_lea.sflag [#allocation3], %s180
        %s182 = sand.u32 %s29, 1
        %s183 = smul.addr %s182, 24
        %s184 = scalar_lea.vmem [#allocation2], %s183
        // Predicated region
        $region33: #{tpu_custom_call.1} parent=31 // pred_check
          %p185 = pneg %p42
        $region34: #{tpu_custom_call.1} parent=31 // pred_check_branch
          %187 = sbr.rel (%p185) target = $region36
        $region35: #{tpu_custom_call.1} parent=31 // pred_region
          %189 = dma.done %s181, 384
        $region36: #{tpu_custom_call.1} parent=31 // pred_fallthru
          _
        // Predicated region
        $region37: #{tpu_custom_call.1} parent=31 // pred_check
          %p190 = pneg %p63
        $region38: #{tpu_custom_call.1} parent=31 // pred_check_branch
          %192 = sbr.rel (%p190) target = $region40
        $region39: #{tpu_custom_call.1} parent=31 // pred_region
          %194 = dma.done [#allocation6], 96
        $region40: #{tpu_custom_call.1} parent=31 // pred_fallthru
          _
        // Predicated region
        $region41: #{tpu_custom_call.1} parent=31 // pred_check
          %p195 = pneg %p84
        $region42: #{tpu_custom_call.1} parent=31 // pred_check_branch
          %197 = sbr.rel (%p195) target = $region44
        $region43: #{tpu_custom_call.1} parent=31 // pred_region
          %199 = dma.done [#allocation6], 96
        $region44: #{tpu_custom_call.1} parent=31 // pred_fallthru
          _
        %s200 = sand.u32 %s29, 1
        %s201 = scalar_lea.sflag [#allocation3], %s200
        %s202 = sand.u32 %s29, 1
        %s203 = smul.addr %s202, 24
        %s204 = scalar_lea.vmem [#allocation2], %s203
        %p205 = pneg %p42
        %p206 = pneg %p39
        %p207 = pneg %p63
        %p208 = pneg %p60
        %p209 = pneg %p84
        %p210 = pneg %p81
        %p211 = pneg %p110
        %p212 = pneg %p107
        %s213 = sand.u32 %s97, 1
        %s214 = scalar_lea.sflag [#allocation4], %s213
        %s215 = sand.u32 %s97, 1
        %s216 = smul.addr %s215, 24
        %s217 = scalar_lea.vmem [#allocation8], %s216
        %v218 = vld [vmem:[%s184] sm:$0xff]
        %v219 = vld [vmem:[%s184 + $0x8] sm:$0xff]
        %v220 = vld [vmem:[%s184 + $0x10] sm:$0xff]
        %v221 = vunpack.c.l.bf16 %v218
        %v222 = vunpack.c.h.bf16 %v218
        %v223 = vunpack.c.l.bf16 %v219
        %v224 = vunpack.c.h.bf16 %v219
        %v225 = vunpack.c.l.bf16 %v220
        %v226 = vunpack.c.h.bf16 %v220
        %v227 = vld [vmem:[#allocation5] sm:$0x3f]
        %v228 = vld [vmem:[#allocation7] sm:$0x3f]
        %v229 = vadd.f32 %v221, %v222
        %v230 = vadd.f32 %v229, %v223
        %v231 = vadd.f32 %v230, %v224
        %v232 = vadd.f32 %v231, %v225
        %v233 = vadd.f32 %v232, %v226
        %234 = vadd.xlane.f32.xlu0 %v233
        %v235 = vpop.xlane.xlu0 %234
        %v236 = vrcp.pop 768.0
        %v237 = vmul.f32 768.0, %v236
        %v238 = vsub.f32 1.0, %v237
        %v239 = vmul.f32 %v236, %v238
        %v240 = vadd.f32 %v236, %v239
        %vm241 = vweird.f32 %v236
        %v242 = vsel %vm241, %v236, %v240
        %v243 = vmul.f32 %v235, %v242
        %v244 = vsub.f32 %v221, %v243
        %v245 = vsub.f32 %v222, %v243
        %v246 = vsub.f32 %v223, %v243
        %v247 = vsub.f32 %v224, %v243
        %v248 = vsub.f32 %v225, %v243
        %v249 = vsub.f32 %v226, %v243
        %v250 = vmul.f32 %v244, %v244
        %v251 = vmul.f32 %v245, %v245
        %v252 = vmul.f32 %v246, %v246
        %v253 = vmul.f32 %v247, %v247
        %v254 = vmul.f32 %v248, %v248
        %v255 = vmul.f32 %v249, %v249
        %v256 = vadd.f32 %v250, %v251
        %v257 = vadd.f32 %v256, %v252
        %v258 = vadd.f32 %v257, %v253
        %v259 = vadd.f32 %v258, %v254
        %v260 = vadd.f32 %v259, %v255
        %261 = vadd.xlane.f32.xlu0 %v260
        %v262 = vpop.xlane.xlu0 %261
        %v263 = vmul.f32 %v262, %v242
        %v264 = vadd.f32 %v263, 1e-12
        %v265 = vrsqrt.pop %v264
        %v266 = vmul.f32 %v265, %v264
        %v267 = vmul.f32 %v266, %v265
        %v268 = vmul.f32 0.5, %v267
        %v269 = vsub.f32 1.5, %v268
        %v270 = vmul.f32 %v265, %v269
        %vm271 = vweird.f32 %v264
        %vm272 = vweird.f32 %v265
        %vm273 = vmor %vm271, %vm272
        %v274 = vsel %vm273, %v265, %v270
        %v275 = vmul.f32 %v244, %v274
        %v276 = vmul.f32 %v245, %v274
        %v277 = vmul.f32 %v246, %v274
        %v278 = vmul.f32 %v247, %v274
        %v279 = vmul.f32 %v248, %v274
        %v280 = vmul.f32 %v249, %v274
        %v282 = vperm.slane %v227, 0
        %v283 = vperm.slane %v227, 1
        %v284 = vperm.slane %v227, 2
        %v285 = vperm.slane %v227, 3
        %v286 = vperm.slane %v227, 4
        %v287 = vperm.slane %v227, 5
        %v294 = vmul.f32 %v275, %v282
        %v295 = vmul.f32 %v276, %v283
        %v296 = vmul.f32 %v277, %v284
        %v297 = vmul.f32 %v278, %v285
        %v298 = vmul.f32 %v279, %v286
        %v299 = vmul.f32 %v280, %v287
        %v301 = vperm.slane %v228, 0
        %v302 = vperm.slane %v228, 1
        %v303 = vperm.slane %v228, 2
        %v304 = vperm.slane %v228, 3
        %v305 = vperm.slane %v228, 4
        %v306 = vperm.slane %v228, 5
        %v313 = vadd.f32 %v294, %v301
        %v314 = vadd.f32 %v295, %v302
        %v315 = vadd.f32 %v296, %v303
        %v316 = vadd.f32 %v297, %v304
        %v317 = vadd.f32 %v298, %v305
        %v318 = vadd.f32 %v299, %v306
        %v319 = vpack.c.bf16 %v314, %v313
        %v320 = vpack.c.bf16 %v316, %v315
        %v321 = vpack.c.bf16 %v318, %v317
        %322 = vst [vmem:[%s217] sm:$0xff] %v319
        %323 = vst [vmem:[%s217 + $0x8] sm:$0xff] %v320
        %324 = vst [vmem:[%s217 + $0x10] sm:$0xff] %v321
        %s325 = sand.u32 %s97, 1
        %s326 = scalar_lea.sflag [#allocation4], %s325
        %s327 = sand.u32 %s97, 1
        %s328 = smul.addr %s327, 24
        %s329 = scalar_lea.vmem [#allocation8], %s328
        // Predicated region
        $region45: #{tpu_custom_call.1} parent=31 // pred_check
          %p330 = pneg %p107
        $region46: #{tpu_custom_call.1} parent=31 // pred_check_branch
          %332 = sbr.rel (%p330) target = $region48
        $region47: #{tpu_custom_call.1} parent=31 // pred_region
          %334 = vsyncadd %s326, 0
          %s335 = smul.addr %s21, 6
          %s336 = smul.addr %s335, 4
          %s337 = scalar_lea.hbm %s3, %s336
          %s339 = sshll.u32 %s329, 4
          %s340 = int_to_ptr.vmem [resolvable:$true] %s339
          %s341 = sshll.u32 %s337, 4
          %s342 = int_to_ptr.hbm [resolvable:$true] %s341
          %344 = dma.vmem_to_hbm [thread:$0]  %s340, 384, %s342, %s326
        $region48: #{tpu_custom_call.1} parent=31 // pred_fallthru
          _
      $region32: #{tpu_custom_call.1} parent=5 // pred_fallthru
        _
      %p345 = scmp.le.s32.totalorder 2, %s16
      // Predicated region
      $region49: #{tpu_custom_call.1} parent=5 // pred_check
        %p346 = pneg %p345
      $region50: #{tpu_custom_call.1} parent=5 // pred_check_branch
        %348 = sbr.rel (%p346) target = $region52
      $region51: #{tpu_custom_call.1} parent=5 // pred_region
        %s349 = ssub.s32 %s16, 2
        // Predicated region
        $region53: #{tpu_custom_call.1} parent=51 // pred_check
          %p350 = pneg %p113
        $region54: #{tpu_custom_call.1} parent=51 // pred_check_branch
          %352 = sbr.rel (%p350) target = $region56
        $region55: #{tpu_custom_call.1} parent=51 // pred_region
          %s353 = sand.u32 %s98, 1
          %s354 = scalar_lea.sflag [#allocation4], %s353
          %s355 = sand.u32 %s98, 1
          %s356 = smul.addr %s355, 24
          %s357 = scalar_lea.vmem [#allocation8], %s356
          %359 = dma.done %s354, 384
        $region56: #{tpu_custom_call.1} parent=51 // pred_fallthru
          _
      $region52: #{tpu_custom_call.1} parent=5 // pred_fallthru
        _
    $region6: #{tpu_custom_call.1} parent=1 // loop_footer
      %s20 = sadd.s32 1, %s16
    $region7: #{tpu_custom_call.1} parent=1 // loop_footer_branch
      %15 = sbr.rel target = $region3
    $region8: #{tpu_custom_call.1} parent=1 // loop_exit
      _
    %360 = vsyncpa [#allocation3], 1
    %s361 = scalar_lea.sflag [#allocation3], 1
    %362 = vsyncpa %s361, 1
    %363 = vsyncpa [#allocation6], 1
    %364 = vsyncpa [#allocation4], 1
    %s365 = scalar_lea.sflag [#allocation4], 1
    %366 = vsyncpa %s365, 1

</llo_original>
